<compile_context>
chip_gen: v7x
topology: tpu7x:2x2x1
jax: 0.10.0
libtpu: 0.0.40
codegen_flags: <defaults>
</compile_context>

<pallas_src>
import functools

import jax
import jax.numpy as jnp
from jax import lax
from jax.experimental import pallas as pl
from jax.experimental.pallas import tpu as pltpu

_EPS = 1e-8  # torch.nn.functional.cosine_similarity default eps


def _cosine_loss_kernel(yp_ref, yt_ref, out_ref, *, n_rows, tile_rows, needs_mask):
    yp = yp_ref[...]                       # (T, C) in the input dtype (f32 or bf16)
    yt = yt_ref[...]                       # (T, 1) int32 labels
    t, c = yp.shape

    # numerator <yp_i, one_hot(yt_i)> = yp[i, yt[i]] via select against a (1, C)
    # iota broadcast over the (T, 1) labels (no dense (T, C) iota, no one-hot).
    col_ids = lax.broadcasted_iota(jnp.int32, (1, c), 1)              # (1, C)
    masked = jnp.where(col_ids == yt, yp, jnp.zeros((), dtype=yp.dtype))
    dot = jnp.sum(masked, axis=1, keepdims=True, dtype=jnp.float32)   # (T, 1) f32

    # ||yp_i||^2: square in the native dtype, accumulate the reduction in f32.
    sumsq = jnp.sum(yp * yp, axis=1, keepdims=True, dtype=jnp.float32)

    # cos_i = dot_i / max(||yp_i||, eps) == dot_i * rsqrt(max(sum(yp_i^2), eps^2))
    cos = dot * lax.rsqrt(jnp.maximum(sumsq, _EPS * _EPS))            # (T, 1) f32

    if needs_mask:
        # Only emitted when N % tile_rows != 0: zero rows past the true batch.
        # (jnp.where *selects* 0.0, so NaN/Inf in padded garbage never propagates.)
        row_ids = pl.program_id(0) * tile_rows + lax.broadcasted_iota(
            jnp.int32, (t, 1), 0)
        cos = jnp.where(row_ids < n_rows, cos, 0.0)

    # Per-tile partial sum -> this tile's private output block (no carried state,
    # so the grid axis can be "parallel" and split across TensorCores on v7x).
    out_ref[...] = jnp.sum(cos, axis=0, keepdims=True).reshape(1, 1, 1)


def _sublane_multiple(itemsize):
    # f32: 8, bf16/f16: 16, int8/fp8: 32
    return 16 if itemsize == 2 else (32 if itemsize == 1 else 8)


def _choose_tile_rows(n, c, itemsize):
    sub = _sublane_multiple(itemsize)
    # yp row + lane-padded (x128) int32 label row per batch element (true VMEM cost).
    row_bytes = c * itemsize + 128 * 4
    target = 6 << 20                       # ~6 MiB per pipeline buffer (v7x-safe)
    tile = max(sub, (target // row_bytes) // sub * sub)
    tile = min(tile, 8192)
    n_pad = ((n + sub - 1) // sub) * sub   # don't make the block bigger than needed
    return max(sub, min(tile, n_pad))


def cosine_loss(yp: jax.Array, yt: jax.Array, *, tile_rows: int | None = None) -> jax.Array:
    """yp: (N, C) float predictions (f32 or bf16); yt: (N,) integer class labels.

    Fast path: feed bf16 predictions — the kernel keeps them in bf16 (halving
    HBM bytes on v5e/v6e and VALU ops on v6e/v7x) and accumulates in f32.
    """
    n, c = yp.shape
    if not jnp.issubdtype(yp.dtype, jnp.floating):
        yp = yp.astype(jnp.float32)
    itemsize = jnp.dtype(yp.dtype).itemsize
    sub = _sublane_multiple(itemsize)

    if tile_rows is None:
        tile_rows = _choose_tile_rows(n, c, itemsize)
    else:
        # Validate user-supplied tile_rows against the dtype sublane requirement.
        tile_rows = max(sub, ((int(tile_rows) + sub - 1) // sub) * sub)

    num_tiles = pl.cdiv(n, tile_rows)
    needs_mask = (n % tile_rows) != 0
    yt2d = yt.astype(jnp.int32).reshape(n, 1)

    # Double-buffered yp tile + lane-padded label tile + headroom; cap at 48 MiB
    # so the same code leaves compiler scratch headroom on v7x (64 MiB/TC VMEM).
    tile_bytes = tile_rows * c * itemsize + tile_rows * 128 * 4
    working = 2 * tile_bytes + (1 << 20)
    vmem_limit = int(min(48 << 20, max(16 << 20, 2 * working)))

    kernel = functools.partial(
        _cosine_loss_kernel, n_rows=n, tile_rows=tile_rows, needs_mask=needs_mask)

    partials = pl.pallas_call(
        kernel,
        out_shape=jax.ShapeDtypeStruct((num_tiles, 1, 1), jnp.float32),
        grid=(num_tiles,),
        in_specs=[
            pl.BlockSpec((tile_rows, c), lambda i: (i, 0)),    # yp tile
            pl.BlockSpec((tile_rows, 1), lambda i: (i, 0)),    # label tile
        ],
        out_specs=pl.BlockSpec((1, 1, 1), lambda i: (i, 0, 0)),  # per-tile partial
        compiler_params=pltpu.CompilerParams(
            dimension_semantics=("parallel",),   # lets v7x split tiles across 2 TCs
            vmem_limit_bytes=vmem_limit,
        ),
    )(yp, yt2d)

    # Tiny (num_tiles,) reduction + negate + mean outside the kernel.
    return -jnp.sum(partials.reshape(-1)) / n


def _reference(yp, yt):
    # Pure-JAX reference mirroring torch semantics.
    yp = yp.astype(jnp.float32)
    c = yp.shape[1]
    onehot = jax.nn.one_hot(yt, c, dtype=jnp.float32)
    dot = jnp.sum(yp * onehot, axis=1)
    norm = jnp.sqrt(jnp.sum(yp * yp, axis=1))
    cos = dot / jnp.maximum(norm, _EPS)
    return -jnp.mean(cos)


if __name__ == "__main__":
    key = jax.random.PRNGKey(0)
    k1, k2, k3, k4 = jax.random.split(key, 4)

    # Case 1: small, aligned batch (single tile).
    N, C = 8, 32
    yp = jax.random.normal(k1, (N, C), dtype=jnp.float32)
    yt = jax.random.randint(k2, (N,), 0, C, dtype=jnp.int32)
    loss = jax.block_until_ready(cosine_loss(yp, yt))
    ref = jax.block_until_ready(_reference(yp, yt))
    assert jnp.allclose(loss, ref, atol=1e-5, rtol=1e-4), (loss, ref)

    # Case 2: N not a multiple of the tile -> multi-tile "parallel" grid with
    # per-tile partial sums and statically-gated tail-row masking.
    N2, C2 = 37, 32
    yp2 = jax.random.normal(k3, (N2, C2), dtype=jnp.float32)
    yt2 = jax.random.randint(k4, (N2,), 0, C2, dtype=jnp.int32)
    loss2 = jax.block_until_ready(cosine_loss(yp2, yt2, tile_rows=8))
    ref2 = jax.block_until_ready(_reference(yp2, yt2))
    assert jnp.allclose(loss2, ref2, atol=1e-5, rtol=1e-4), (loss2, ref2)

    # Case 3: bf16 fast path — predictions stay bf16 in-kernel, f32 accumulation.
    loss3 = jax.block_until_ready(cosine_loss(yp2.astype(jnp.bfloat16), yt2))
    ref3 = jax.block_until_ready(_reference(yp2.astype(jnp.bfloat16), yt2))
    assert jnp.allclose(loss3, ref3, atol=1e-2, rtol=1e-2), (loss3, ref3)

    print("KERNEL_OK")
</pallas_src>

<mosaic_0001>
module attributes {stable_mosaic.version = 11 : i64} {
  func.func @_cosine_loss_kernel(%arg0: i32, %arg1: memref<8x32xf32, #tpu.memory_space<vmem>>, %arg2: memref<8x1xi32, #tpu.memory_space<vmem>>, %arg3: memref<1x1x1xf32, #tpu.memory_space<vmem>>) attributes {dimension_semantics = [#tpu.dimension_semantics<parallel>], iteration_bounds = array<i64: 1>, scalar_prefetch = 0 : i64, scratch_operands = 0 : i64, tpu.core_type = #tpu.core_type<tc>, window_params = [{transform_indices = @transform_0, window_bounds = array<i64: 8, 32>}, {transform_indices = @transform_1, window_bounds = array<i64: 8, 1>}, {transform_indices = @transform_2, window_bounds = array<i64: 1, 1, 1>}]} {
    %c0 = arith.constant 0 : index
    %c0_0 = arith.constant 0 : index
    %0 = vector.load %arg1[%c0, %c0_0] : memref<8x32xf32, #tpu.memory_space<vmem>>, vector<8x32xf32>
    %c0_1 = arith.constant 0 : index
    %c0_2 = arith.constant 0 : index
    %1 = vector.load %arg2[%c0_1, %c0_2] : memref<8x1xi32, #tpu.memory_space<vmem>>, vector<8x1xi32>
    %2 = tpu.iota {dimensions = array<i32: 1>} : vector<1x32xi32>
    %3 = vector.broadcast %2 : vector<1x32xi32> to vector<8x32xi32>
    %4 = vector.broadcast %1 : vector<8x1xi32> to vector<8x32xi32>
    %5 = arith.cmpi eq, %3, %4 : vector<8x32xi32>
    %cst = arith.constant 0.000000e+00 : f32
    %6 = vector.broadcast %cst : f32 to vector<8x32xf32>
    %7 = arith.select %5, %0, %6 : vector<8x32xi1>, vector<8x32xf32>
    %cst_3 = arith.constant dense<0.000000e+00> : vector<8xf32>
    %8 = vector.multi_reduction <add>, %7, %cst_3 [1] : vector<8x32xf32> to vector<8xf32>
    %9 = vector.shape_cast %8 : vector<8xf32> to vector<8x1xf32>
    %10 = arith.mulf %0, %0 : vector<8x32xf32>
    %cst_4 = arith.constant dense<0.000000e+00> : vector<8xf32>
    %11 = vector.multi_reduction <add>, %10, %cst_4 [1] : vector<8x32xf32> to vector<8xf32>
    %12 = vector.shape_cast %11 : vector<8xf32> to vector<8x1xf32>
    %cst_5 = arith.constant 1.000000e-16 : f32
    %13 = vector.broadcast %cst_5 : f32 to vector<8x1xf32>
    %14 = arith.maximumf %12, %13 : vector<8x1xf32>
    %15 = math.rsqrt %14 : vector<8x1xf32>
    %16 = arith.mulf %9, %15 : vector<8x1xf32>
    %cst_6 = arith.constant dense<0.000000e+00> : vector<1xf32>
    %17 = vector.multi_reduction <add>, %16, %cst_6 [0] : vector<8x1xf32> to vector<1xf32>
    %18 = vector.shape_cast %17 : vector<1xf32> to vector<1x1xf32>
    %19 = vector.shape_cast %18 : vector<1x1xf32> to vector<1x1x1xf32>
    %c0_7 = arith.constant 0 : index
    %c0_8 = arith.constant 0 : index
    %c0_9 = arith.constant 0 : index
    %20 = vector.load %arg3[%c0_7, %c0_8, %c0_9] : memref<1x1x1xf32, #tpu.memory_space<vmem>>, vector<1x1x1xf32>
    tpu.vector_store %arg3[%c0_7, %c0_8, %c0_9], %19 {strides = array<i32>} : memref<1x1x1xf32, #tpu.memory_space<vmem>>, vector<1x1x1xf32>,
    return
  }
  func.func @transform_0(%arg0: i32) -> (i32, i32) {
    %c0_i32 = arith.constant 0 : i32
    %c0_i32_0 = arith.constant 0 : i32
    return %arg0, %c0_i32 : i32, i32
  }
  func.func @transform_1(%arg0: i32) -> (i32, i32) {
    %c0_i32 = arith.constant 0 : i32
    %c0_i32_0 = arith.constant 0 : i32
    return %arg0, %c0_i32 : i32, i32
  }
  func.func @transform_2(%arg0: i32) -> (i32, i32, i32) {
    %c0_i32 = arith.constant 0 : i32
    %c0_i32_0 = arith.constant 0 : i32
    %c0_i32_1 = arith.constant 0 : i32
    return %arg0, %c0_i32, %c0_i32_0 : i32, i32, i32
  }
}

</mosaic_0001>

<llo_original>
// kernel: tpu_custom_call.1
$region0: #{tpu_custom_call.1}
  #allocation0 [shape = 'u32[]', space=smem, size = 0x4, offset = 0x4, fixed_abs, tag = 'smem constant byte address 0x4 - core index']
  #allocation1 [shape = 'u32[144,128]{1,0:T(1,128)}', space=vmem, size = 0x12000, scoped, tag = 'internal scratch']
  %s0 = inlined_call_operand.vmem [shape: f32[8,32], index: 0, kind: input, shape index: {}]
  %s1 = inlined_call_operand.vmem [shape: s32[8,1], index: 1, kind: input, shape index: {}]
  %s2 = inlined_call_operand.hbm [shape: f32[1,1,1], index: 2, kind: output, shape index: {}]
  %s3 = sld [smem:[#allocation0]]
  $region18: #{tpu_custom_call.1} parent=0
    _
  %s5 = ssub.s32 1, %s3
  %s6 = scalar_select 0, %s5, %s3
  $region1: #{tpu_custom_call.1} parent=0
    #allocation2 [shape = 'u8[512]{0}', space=vmem, size = 0x400, scoped, tag = 'output window, operand 0, single buffered']
    #allocation3 [shape = 's32[1]{0}', space=sflag, size = 0x4, scoped, tag = 'scoped memory for tpu_custom_call.1']
    %7 = vsyncpa [#allocation3], 0
    // Predicated region
    $region2: #{tpu_custom_call.1} parent=1 // pred_check
      _
    $region3: #{tpu_custom_call.1} parent=1 // pred_check_branch
      %9 = sbr.rel (0) target = $region5
    $region4: #{tpu_custom_call.1} parent=1 // pred_region
      _
    $region5: #{tpu_custom_call.1} parent=1 // pred_fallthru
      _
    // Predicated region
    $region6: #{tpu_custom_call.1} parent=1 // pred_check
      _
    $region7: #{tpu_custom_call.1} parent=1 // pred_check_branch
      %11 = sbr.rel (0) target = $region9
    $region8: #{tpu_custom_call.1} parent=1 // pred_region
      _
    $region9: #{tpu_custom_call.1} parent=1 // pred_fallthru
      _
    %v12 = vld [vmem:[%s0] sm:$0xff]
    %v13 = vld [vmem:[%s1] sm:$0xff]
    %v14 = vlaneseq
    %v15 = vand.u32 %v14, 127
    %16 = vset.pattern.permute.xlu0 0
    %17 = vperm.xlu0 %16, %v13
    %v18 = vpop.permute.xlu0 %17
    %vm19 = vcmp.eq.s32.totalorder %v15, %v18
    %v20 = vsel %vm19, %v12, 0.0
    %vm21 = vcmask 261120
    %v22 = vsel %vm21, %v20, 0.0
    %23 = vadd.xlane.f32.xlu0 %v22
    %v24 = vpop.xlane.xlu0 %23
    %v25 = vmul.f32 %v12, %v12
    %v26 = vsel %vm21, %v25, 0.0
    %27 = vadd.xlane.f32.xlu0 %v26
    %v28 = vpop.xlane.xlu0 %27
    %v29 = vmax.f32 %v28, 1e-16
    %v30 = vrsqrt.pop %v29
    %v31 = vmul.f32 %v24, %v30
    %v32 = vrot.slane %v31, 4
    %v33 = vadd.f32 %v31, %v32
    %v34 = vrot.slane %v33, 2
    %v35 = vadd.f32 %v33, %v34
    %v36 = vrot.slane %v35, 1
    %v37 = vadd.f32 %v35, %v36
    %vm38 = vcmask 0
    %39 = vst.msk [vmem:[#allocation2] sm:$0x1] %vm38, %v37
    // Predicated region
    $region10: #{tpu_custom_call.1} parent=1 // pred_check
      _
    $region11: #{tpu_custom_call.1} parent=1 // pred_check_branch
      %41 = sbr.rel (0) target = $region13
    $region12: #{tpu_custom_call.1} parent=1 // pred_region
      %s43 = ssub.s32 16, 16
      %44 = vsyncadd [#allocation3], %s43
      %s46 = sshll.u32 [#allocation2], 4
      %s47 = int_to_ptr.vmem [resolvable:$true] %s46
      %49 = dma.vmem_to_hbm [thread:$0]  %s47, 16, %s2, [#allocation3]
    $region13: #{tpu_custom_call.1} parent=1 // pred_fallthru
      _
    // Predicated region
    $region14: #{tpu_custom_call.1} parent=1 // pred_check
      _
    $region15: #{tpu_custom_call.1} parent=1 // pred_check_branch
      %51 = sbr.rel (0) target = $region17
    $region16: #{tpu_custom_call.1} parent=1 // pred_region
      %52 = dma.done [#allocation3], 16
    $region17: #{tpu_custom_call.1} parent=1 // pred_fallthru
      _
    %53 = vsyncpa [#allocation3], 1

</llo_original>
